<compile_context>
chip_gen: v7x
topology: tpu7x:2x2x1
jax: 0.10.0
libtpu: 0.0.40
codegen_flags: <defaults>
</compile_context>

<pallas_src>
import math

import jax
import jax.numpy as jnp
from jax.experimental import pallas as pl
from jax.experimental.pallas import tpu as pltpu

# ---- module constants (defaults from __init__) ------------------------------
HBAR = 1.0
MASS = 1.0
R_MAX = 20.0
EPS = 1e-6

# point-cloud tile shape
ROWS, COLS = 8, 128
N_POINTS = ROWS * COLS
INV_N = 1.0 / float(N_POINTS)


def _fullsum(v):
    """Full sum of a 2-D tile, keeping (1, 1) shape (robust Mosaic reduce)."""
    return jnp.sum(v, axis=(0, 1), keepdims=True)


def quantum_loss_kernel(psi_ref, x_ref, y_ref, psi_true_ref, lap_ref,
                        log_sigma_ref, out_ref):
    psi = psi_ref[...]          # (8, 128) f32
    x = x_ref[...]
    y = y_ref[...]
    psi_true = psi_true_ref[...]
    lap = lap_ref[...]          # psi_xx + psi_yy (precomputed autodiff)

    psi2 = psi * psi            # reused three times

    # --- Hamiltonian applied to psi: V = -1/r, r = sqrt(x^2+y^2+eps) ---------
    r2 = x * x + y * y + EPS
    V = -jax.lax.rsqrt(r2)      # one EUP op instead of sqrt + divide
    H_psi = (-(HBAR ** 2) / (2.0 * MASS)) * lap + V * psi

    diff = psi - psi_true
    # r >= 20  <=>  r^2 >= 400  (r^2 already includes the +eps, as in torch)
    boundary_mask = (r2 >= R_MAX * R_MAX).astype(jnp.float32)

    # --- independent full-tile reductions -------------------------------------
    sum_Hpsi_psi = _fullsum(H_psi * psi)
    sum_psi2 = _fullsum(psi2)
    sum_sup = _fullsum(diff * diff)
    num_boundary = _fullsum(boundary_mask)
    boundary_sum = _fullsum(psi2 * boundary_mask)

    numerator = sum_Hpsi_psi * INV_N          # mean(H_psi * psi)
    mean_psi2 = sum_psi2 * INV_N              # mean(psi^2)
    supervised_loss = sum_sup * INV_N         # mean((psi - psi_true)^2)

    # --- Rayleigh-quotient energy + Schrodinger residual ----------------------
    denominator = mean_psi2 + EPS
    E = numerator / denominator               # (1, 1)

    # Direct residual: numerically stable in f32 (no cancellation), costs one
    # extra FMA pass + one extra full-tile reduce at this tiny size.
    resid = H_psi - E * psi
    schrodinger_loss = _fullsum(resid * resid) * INV_N

    # --- boundary loss (mean of psi^2 over r >= r_max, 0 if empty) ------------
    boundary_loss = jnp.where(
        num_boundary > 0.0,
        boundary_sum / jnp.maximum(num_boundary, 1.0),
        jnp.zeros_like(boundary_sum))

    # --- normalization (+EPS matches the torch reference) ---------------------
    normalization_loss = (mean_psi2 - 1.0) ** 2 + EPS

    # --- homoscedastic uncertainty weighting: ONE vector exp ------------------
    # loss_i / (2*sigma_i^2) + log(sigma_i) = loss_i * 0.5*exp(-2*ls_i) + ls_i
    ls = log_sigma_ref[...]                    # (1, 4) f32 in VMEM
    w = 0.5 * jnp.exp(-2.0 * ls)               # single EUP pass for all four
    sum_ls = jnp.sum(ls, axis=1, keepdims=True)  # (1, 1): + sum_i log(sigma_i)

    total = (schrodinger_loss * w[:, 0:1]
             + boundary_loss * w[:, 1:2]
             + normalization_loss * w[:, 2:3]
             + supervised_loss * w[:, 3:4]
             + sum_ls)

    # scalar result lives in SMEM (no lane-sparse VMEM masked store / padded
    # epilogue DMA)
    out_ref[0, 0] = total[0, 0]


def quantum_loss_xyz(psi_pred, x, y, psi_true, laplacian, log_sigmas):
    """Point-cloud fields (8,128) f32; log_sigmas (4,) f32. Returns scalar."""
    log_sigmas_2d = log_sigmas.astype(jnp.float32).reshape(1, 4)

    cost = pl.CostEstimate(
        flops=25 * N_POINTS,
        transcendentals=N_POINTS + 4,
        bytes_accessed=5 * N_POINTS * 4 + 4 * 4 + 4,
    )

    vmem_spec = pl.BlockSpec(memory_space=pltpu.MemorySpace.VMEM)
    out = pl.pallas_call(
        quantum_loss_kernel,
        out_shape=jax.ShapeDtypeStruct((1, 1), jnp.float32),
        in_specs=[vmem_spec, vmem_spec, vmem_spec, vmem_spec, vmem_spec,
                  vmem_spec],
        out_specs=pl.BlockSpec(memory_space=pltpu.MemorySpace.SMEM),
        cost_estimate=cost,
    )(psi_pred, x, y, psi_true, laplacian, log_sigmas_2d)
    return out[0, 0]


# -----------------------------------------------------------------------------
# Synthetic differentiable "network" psi(x, y) to produce psi_pred and its
# laplacian (the role torch.autograd.grad plays against the upstream model).
# -----------------------------------------------------------------------------
def make_psi_fn(key, hidden=32):
    k1, k2, k3 = jax.random.split(key, 3)
    W1 = 0.1 * jax.random.normal(k1, (2, hidden), dtype=jnp.float32)
    b1 = 0.05 * jax.random.normal(k2, (hidden,), dtype=jnp.float32)
    W2 = 0.1 * jax.random.normal(k3, (hidden,), dtype=jnp.float32)
    b2 = jnp.float32(0.01)

    def psi_fn(xi, yi):
        h = jnp.tanh(xi * W1[0] + yi * W1[1] + b1)
        return jnp.dot(h, W2) + b2

    return psi_fn


if __name__ == "__main__":
    key = jax.random.PRNGKey(0)
    k_pts, k_net = jax.random.split(key)

    # collocation points spanning past the r_max = 20 boundary so both
    # branches of the boundary term are exercised
    pts = jax.random.uniform(k_pts, (N_POINTS, 2), dtype=jnp.float32,
                             minval=-25.0, maxval=25.0)
    x_flat, y_flat = pts[:, 0], pts[:, 1]

    psi_fn = make_psi_fn(k_net)

    # psi_pred and its second derivatives (laplacian) via autodiff (glue JAX)
    psi_pred_flat = jax.vmap(psi_fn)(x_flat, y_flat)
    psi_xx_flat = jax.vmap(jax.grad(jax.grad(psi_fn, argnums=0), argnums=0))(
        x_flat, y_flat)
    psi_yy_flat = jax.vmap(jax.grad(jax.grad(psi_fn, argnums=1), argnums=1))(
        x_flat, y_flat)
    lap_flat = psi_xx_flat + psi_yy_flat

    # synthetic "ground truth": hydrogen-like ground state exp(-r)
    r_flat = jnp.sqrt(x_flat ** 2 + y_flat ** 2 + EPS)
    psi_true_flat = jnp.exp(-r_flat)

    # reshape point clouds into the (8, 128) kernel tile layout (f32 kept on
    # purpose: kernel is latency-bound and v5e has no bf16 VPU/EUP path)
    psi_pred = psi_pred_flat.reshape(ROWS, COLS)
    x_t = x_flat.reshape(ROWS, COLS)
    y_t = y_flat.reshape(ROWS, COLS)
    psi_true = psi_true_flat.reshape(ROWS, COLS)
    laplacian = lap_flat.reshape(ROWS, COLS)

    # nn.Parameter(torch.tensor(0.0)) x 4 -> deterministic zeros
    log_sigmas = jnp.zeros((4,), dtype=jnp.float32)

    total_loss = quantum_loss_xyz(psi_pred, x_t, y_t, psi_true, laplacian,
                                  log_sigmas)
    total_loss = jax.block_until_ready(total_loss)

    val = float(total_loss)
    if math.isnan(val) or math.isinf(val):
        raise ValueError("NaN or Inf detected in total_loss")

    print("KERNEL_OK")
</pallas_src>

<mosaic_0001>
module attributes {stable_mosaic.version = 11 : i64} {
  func.func @quantum_loss_kernel(%arg0: memref<8x128xf32, #tpu.memory_space<vmem>>, %arg1: memref<8x128xf32, #tpu.memory_space<vmem>>, %arg2: memref<8x128xf32, #tpu.memory_space<vmem>>, %arg3: memref<8x128xf32, #tpu.memory_space<vmem>>, %arg4: memref<8x128xf32, #tpu.memory_space<vmem>>, %arg5: memref<1x4xf32, #tpu.memory_space<vmem>>, %arg6: memref<1x1xf32, #tpu.memory_space<smem>>) attributes {dimension_semantics = [], scalar_prefetch = 0 : i64, scratch_operands = 0 : i64, tpu.core_type = #tpu.core_type<tc>} {
    %c0 = arith.constant 0 : index
    %c0_0 = arith.constant 0 : index
    %0 = vector.load %arg0[%c0, %c0_0] : memref<8x128xf32, #tpu.memory_space<vmem>>, vector<8x128xf32>
    %c0_1 = arith.constant 0 : index
    %c0_2 = arith.constant 0 : index
    %1 = vector.load %arg1[%c0_1, %c0_2] : memref<8x128xf32, #tpu.memory_space<vmem>>, vector<8x128xf32>
    %c0_3 = arith.constant 0 : index
    %c0_4 = arith.constant 0 : index
    %2 = vector.load %arg2[%c0_3, %c0_4] : memref<8x128xf32, #tpu.memory_space<vmem>>, vector<8x128xf32>
    %c0_5 = arith.constant 0 : index
    %c0_6 = arith.constant 0 : index
    %3 = vector.load %arg3[%c0_5, %c0_6] : memref<8x128xf32, #tpu.memory_space<vmem>>, vector<8x128xf32>
    %c0_7 = arith.constant 0 : index
    %c0_8 = arith.constant 0 : index
    %4 = vector.load %arg4[%c0_7, %c0_8] : memref<8x128xf32, #tpu.memory_space<vmem>>, vector<8x128xf32>
    %5 = arith.mulf %0, %0 : vector<8x128xf32>
    %6 = arith.mulf %1, %1 : vector<8x128xf32>
    %7 = arith.mulf %2, %2 : vector<8x128xf32>
    %8 = arith.addf %6, %7 : vector<8x128xf32>
    %cst = arith.constant 9.99999997E-7 : f32
    %9 = vector.broadcast %cst : f32 to vector<8x128xf32>
    %10 = arith.addf %8, %9 : vector<8x128xf32>
    %11 = math.rsqrt %10 : vector<8x128xf32>
    %cst_9 = arith.constant 0.000000e+00 : f32
    %12 = vector.broadcast %cst_9 : f32 to vector<8x128xf32>
    %13 = arith.subf %12, %11 : vector<8x128xf32>
    %cst_10 = arith.constant -5.000000e-01 : f32
    %14 = vector.broadcast %cst_10 : f32 to vector<8x128xf32>
    %15 = arith.mulf %14, %4 : vector<8x128xf32>
    %16 = arith.mulf %13, %0 : vector<8x128xf32>
    %17 = arith.addf %15, %16 : vector<8x128xf32>
    %18 = arith.subf %0, %3 : vector<8x128xf32>
    %cst_11 = arith.constant 4.000000e+02 : f32
    %19 = vector.broadcast %cst_11 : f32 to vector<8x128xf32>
    %20 = arith.cmpf oge, %10, %19 : vector<8x128xf32>
    %21 = arith.extui %20 : vector<8x128xi1> to vector<8x128xi32>
    %22 = arith.sitofp %21 : vector<8x128xi32> to vector<8x128xf32>
    %23 = arith.mulf %17, %0 : vector<8x128xf32>
    %24 = vector.shape_cast %23 : vector<8x128xf32> to vector<1x8x128xf32>
    %cst_12 = arith.constant dense<0.000000e+00> : vector<1xf32>
    %25 = vector.multi_reduction <add>, %24, %cst_12 [1, 2] : vector<1x8x128xf32> to vector<1xf32>
    %26 = vector.shape_cast %25 : vector<1xf32> to vector<1x1x1xf32>
    %27 = vector.extract %26[0, 0, 0] : f32 from vector<1x1x1xf32>
    %28 = vector.broadcast %27 : f32 to vector<1x1xf32>
    %29 = vector.shape_cast %5 : vector<8x128xf32> to vector<1x8x128xf32>
    %cst_13 = arith.constant dense<0.000000e+00> : vector<1xf32>
    %30 = vector.multi_reduction <add>, %29, %cst_13 [1, 2] : vector<1x8x128xf32> to vector<1xf32>
    %31 = vector.shape_cast %30 : vector<1xf32> to vector<1x1x1xf32>
    %32 = vector.extract %31[0, 0, 0] : f32 from vector<1x1x1xf32>
    %33 = vector.broadcast %32 : f32 to vector<1x1xf32>
    %34 = arith.mulf %18, %18 : vector<8x128xf32>
    %35 = vector.shape_cast %34 : vector<8x128xf32> to vector<1x8x128xf32>
    %cst_14 = arith.constant dense<0.000000e+00> : vector<1xf32>
    %36 = vector.multi_reduction <add>, %35, %cst_14 [1, 2] : vector<1x8x128xf32> to vector<1xf32>
    %37 = vector.shape_cast %36 : vector<1xf32> to vector<1x1x1xf32>
    %38 = vector.extract %37[0, 0, 0] : f32 from vector<1x1x1xf32>
    %39 = vector.broadcast %38 : f32 to vector<1x1xf32>
    %40 = vector.shape_cast %22 : vector<8x128xf32> to vector<1x8x128xf32>
    %cst_15 = arith.constant dense<0.000000e+00> : vector<1xf32>
    %41 = vector.multi_reduction <add>, %40, %cst_15 [1, 2] : vector<1x8x128xf32> to vector<1xf32>
    %42 = vector.shape_cast %41 : vector<1xf32> to vector<1x1x1xf32>
    %43 = vector.extract %42[0, 0, 0] : f32 from vector<1x1x1xf32>
    %44 = vector.broadcast %43 : f32 to vector<1x1xf32>
    %45 = arith.mulf %5, %22 : vector<8x128xf32>
    %46 = vector.shape_cast %45 : vector<8x128xf32> to vector<1x8x128xf32>
    %cst_16 = arith.constant dense<0.000000e+00> : vector<1xf32>
    %47 = vector.multi_reduction <add>, %46, %cst_16 [1, 2] : vector<1x8x128xf32> to vector<1xf32>
    %48 = vector.shape_cast %47 : vector<1xf32> to vector<1x1x1xf32>
    %49 = vector.extract %48[0, 0, 0] : f32 from vector<1x1x1xf32>
    %50 = vector.broadcast %49 : f32 to vector<1x1xf32>
    %cst_17 = arith.constant 9.765625E-4 : f32
    %51 = vector.broadcast %cst_17 : f32 to vector<1x1xf32>
    %52 = arith.mulf %28, %51 : vector<1x1xf32>
    %cst_18 = arith.constant 9.765625E-4 : f32
    %53 = vector.broadcast %cst_18 : f32 to vector<1x1xf32>
    %54 = arith.mulf %33, %53 : vector<1x1xf32>
    %cst_19 = arith.constant 9.765625E-4 : f32
    %55 = vector.broadcast %cst_19 : f32 to vector<1x1xf32>
    %56 = arith.mulf %39, %55 : vector<1x1xf32>
    %cst_20 = arith.constant 9.99999997E-7 : f32
    %57 = vector.broadcast %cst_20 : f32 to vector<1x1xf32>
    %58 = arith.addf %54, %57 : vector<1x1xf32>
    %59 = arith.divf %52, %58 : vector<1x1xf32>
    %60 = vector.broadcast %59 : vector<1x1xf32> to vector<8x128xf32>
    %61 = arith.mulf %60, %0 : vector<8x128xf32>
    %62 = arith.subf %17, %61 : vector<8x128xf32>
    %63 = arith.mulf %62, %62 : vector<8x128xf32>
    %64 = vector.shape_cast %63 : vector<8x128xf32> to vector<1x8x128xf32>
    %cst_21 = arith.constant dense<0.000000e+00> : vector<1xf32>
    %65 = vector.multi_reduction <add>, %64, %cst_21 [1, 2] : vector<1x8x128xf32> to vector<1xf32>
    %66 = vector.shape_cast %65 : vector<1xf32> to vector<1x1x1xf32>
    %67 = vector.extract %66[0, 0, 0] : f32 from vector<1x1x1xf32>
    %68 = vector.broadcast %67 : f32 to vector<1x1xf32>
    %cst_22 = arith.constant 9.765625E-4 : f32
    %69 = vector.broadcast %cst_22 : f32 to vector<1x1xf32>
    %70 = arith.mulf %68, %69 : vector<1x1xf32>
    %cst_23 = arith.constant 0.000000e+00 : f32
    %71 = vector.broadcast %cst_23 : f32 to vector<1x1xf32>
    %72 = arith.cmpf ogt, %44, %71 : vector<1x1xf32>
    %cst_24 = arith.constant 1.000000e+00 : f32
    %73 = vector.broadcast %cst_24 : f32 to vector<1x1xf32>
    %74 = arith.maximumf %44, %73 : vector<1x1xf32>
    %75 = arith.divf %50, %74 : vector<1x1xf32>
    %cst_25 = arith.constant 0.000000e+00 : f32
    %76 = vector.broadcast %cst_25 : f32 to vector<1x1xf32>
    %77 = arith.select %72, %75, %76 : vector<1x1xi1>, vector<1x1xf32>
    %cst_26 = arith.constant 1.000000e+00 : f32
    %78 = vector.broadcast %cst_26 : f32 to vector<1x1xf32>
    %79 = arith.subf %54, %78 : vector<1x1xf32>
    %80 = arith.mulf %79, %79 : vector<1x1xf32>
    %cst_27 = arith.constant 9.99999997E-7 : f32
    %81 = vector.broadcast %cst_27 : f32 to vector<1x1xf32>
    %82 = arith.addf %80, %81 : vector<1x1xf32>
    %c0_28 = arith.constant 0 : index
    %c0_29 = arith.constant 0 : index
    %83 = vector.load %arg5[%c0_28, %c0_29] : memref<1x4xf32, #tpu.memory_space<vmem>>, vector<1x4xf32>
    %cst_30 = arith.constant -2.000000e+00 : f32
    %84 = vector.broadcast %cst_30 : f32 to vector<1x4xf32>
    %85 = arith.mulf %84, %83 : vector<1x4xf32>
    %86 = math.exp %85 : vector<1x4xf32>
    %cst_31 = arith.constant 5.000000e-01 : f32
    %87 = vector.broadcast %cst_31 : f32 to vector<1x4xf32>
    %88 = arith.mulf %87, %86 : vector<1x4xf32>
    %cst_32 = arith.constant dense<0.000000e+00> : vector<1xf32>
    %89 = vector.multi_reduction <add>, %83, %cst_32 [1] : vector<1x4xf32> to vector<1xf32>
    %90 = vector.shape_cast %89 : vector<1xf32> to vector<1x1xf32>
    %91 = vector.extract_strided_slice %88 {offsets = [0, 0], sizes = [1, 1], strides = [1, 1]} : vector<1x4xf32> to vector<1x1xf32>
    %92 = arith.mulf %70, %91 : vector<1x1xf32>
    %93 = vector.extract_strided_slice %88 {offsets = [0, 1], sizes = [1, 1], strides = [1, 1]} : vector<1x4xf32> to vector<1x1xf32>
    %94 = arith.mulf %77, %93 : vector<1x1xf32>
    %95 = arith.addf %92, %94 : vector<1x1xf32>
    %96 = vector.extract_strided_slice %88 {offsets = [0, 2], sizes = [1, 1], strides = [1, 1]} : vector<1x4xf32> to vector<1x1xf32>
    %97 = arith.mulf %82, %96 : vector<1x1xf32>
    %98 = arith.addf %95, %97 : vector<1x1xf32>
    %99 = vector.extract_strided_slice %88 {offsets = [0, 3], sizes = [1, 1], strides = [1, 1]} : vector<1x4xf32> to vector<1x1xf32>
    %100 = arith.mulf %56, %99 : vector<1x1xf32>
    %101 = arith.addf %98, %100 : vector<1x1xf32>
    %102 = arith.addf %101, %90 : vector<1x1xf32>
    %103 = vector.extract %102[0, 0] : f32 from vector<1x1xf32>
    %c0_33 = arith.constant 0 : index
    %c0_34 = arith.constant 0 : index
    %104 = memref.load %arg6[%c0_33, %c0_34] : memref<1x1xf32, #tpu.memory_space<smem>>
    memref.store %103, %arg6[%c0_33, %c0_34] : memref<1x1xf32, #tpu.memory_space<smem>>
    return
  }
}

</mosaic_0001>

<llo_original>
// kernel: tpu_custom_call.1
$region0: #{tpu_custom_call.1}
  #allocation0 [shape = 'u32[]', space=smem, size = 0x4, offset = 0x4, fixed_abs, tag = 'smem constant byte address 0x4 - core index']
  #allocation1 [shape = 'u32[144,128]{1,0:T(1,128)}', space=vmem, size = 0x12000, scoped, tag = 'internal scratch']
  %s0 = inlined_call_operand.hbm [shape: f32[8,128], index: 0, kind: input, shape index: {}]
  %s1 = inlined_call_operand.hbm [shape: f32[8,128], index: 1, kind: input, shape index: {}]
  %s2 = inlined_call_operand.hbm [shape: f32[8,128], index: 2, kind: input, shape index: {}]
  %s3 = inlined_call_operand.vmem [shape: f32[8,128], index: 3, kind: input, shape index: {}]
  %s4 = inlined_call_operand.hbm [shape: f32[8,128], index: 4, kind: input, shape index: {}]
  %s5 = inlined_call_operand.vmem [shape: f32[1,4], index: 5, kind: input, shape index: {}]
  %s6 = inlined_call_operand.hbm [shape: f32[1,1], index: 6, kind: output, shape index: {}]
  %s7 = sld [smem:[#allocation0]]
  $region50: #{tpu_custom_call.1} parent=0
    _
  %s9 = ssub.s32 1, %s7
  %s10 = scalar_select 0, %s9, %s7
  $region1: #{tpu_custom_call.1} parent=0
    #allocation2 [shape = 'u8[4096]{0}', space=vmem, size = 0x1000, scoped, tag = 'input window, operand 0, single buffered']
    #allocation3 [shape = 's32[1]{0}', space=sflag, size = 0x4, scoped, tag = 'scoped memory for tpu_custom_call.1']
    #allocation4 [shape = 's32[1]{0}', space=sflag, size = 0x4, scoped, tag = 'scoped memory for tpu_custom_call.1']
    #allocation5 [shape = 'u8[4096]{0}', space=vmem, size = 0x1000, scoped, tag = 'input window, operand 1, single buffered']
    #allocation6 [shape = 's32[1]{0}', space=sflag, size = 0x4, scoped, tag = 'scoped memory for tpu_custom_call.1']
    #allocation7 [shape = 'u8[4096]{0}', space=vmem, size = 0x1000, scoped, tag = 'input window, operand 2, single buffered']
    #allocation8 [shape = 'u8[4096]{0}', space=vmem, size = 0x1000, scoped, tag = 'input window, operand 4, single buffered']
    #allocation9 [shape = 's32[1]{0}', space=sflag, size = 0x4, scoped, tag = 'scoped memory for tpu_custom_call.1']
    #allocation10 [shape = 'u8[512]{0}', space=smem, size = 0x200, scoped, tag = 'output window, operand 0, single buffered']
    %11 = vsyncpa [#allocation3], 0
    %12 = vsyncpa [#allocation6], 0
    %13 = vsyncpa [#allocation9], 0
    %14 = vsyncpa [#allocation4], 0
    // Predicated region
    $region2: #{tpu_custom_call.1} parent=1 // pred_check
      _
    $region3: #{tpu_custom_call.1} parent=1 // pred_check_branch
      %16 = sbr.rel (0) target = $region5
    $region4: #{tpu_custom_call.1} parent=1 // pred_region
      %s18 = ssub.s32 128, 128
      %19 = vsyncadd [#allocation3], %s18
      %s21 = sshll.u32 [#allocation2], 4
      %s22 = int_to_ptr.vmem [resolvable:$true] %s21
      %24 = dma.hbm_to_vmem [thread:$0]  %s0, 128, %s22, [#allocation3]
    $region5: #{tpu_custom_call.1} parent=1 // pred_fallthru
      _
    // Predicated region
    $region6: #{tpu_custom_call.1} parent=1 // pred_check
      _
    $region7: #{tpu_custom_call.1} parent=1 // pred_check_branch
      %26 = sbr.rel (0) target = $region9
    $region8: #{tpu_custom_call.1} parent=1 // pred_region
      %s28 = ssub.s32 128, 128
      %29 = vsyncadd [#allocation6], %s28
      %s31 = sshll.u32 [#allocation5], 4
      %s32 = int_to_ptr.vmem [resolvable:$true] %s31
      %34 = dma.hbm_to_vmem [thread:$0]  %s1, 128, %s32, [#allocation6]
    $region9: #{tpu_custom_call.1} parent=1 // pred_fallthru
      _
    // Predicated region
    $region10: #{tpu_custom_call.1} parent=1 // pred_check
      _
    $region11: #{tpu_custom_call.1} parent=1 // pred_check_branch
      %36 = sbr.rel (0) target = $region13
    $region12: #{tpu_custom_call.1} parent=1 // pred_region
      %s38 = ssub.s32 128, 128
      %39 = vsyncadd [#allocation6], %s38
      %s41 = sshll.u32 [#allocation7], 4
      %s42 = int_to_ptr.vmem [resolvable:$true] %s41
      %44 = dma.hbm_to_vmem [thread:$0]  %s2, 128, %s42, [#allocation6]
    $region13: #{tpu_custom_call.1} parent=1 // pred_fallthru
      _
    // Predicated region
    $region14: #{tpu_custom_call.1} parent=1 // pred_check
      _
    $region15: #{tpu_custom_call.1} parent=1 // pred_check_branch
      %46 = sbr.rel (0) target = $region17
    $region16: #{tpu_custom_call.1} parent=1 // pred_region
      _
    $region17: #{tpu_custom_call.1} parent=1 // pred_fallthru
      _
    // Predicated region
    $region18: #{tpu_custom_call.1} parent=1 // pred_check
      _
    $region19: #{tpu_custom_call.1} parent=1 // pred_check_branch
      %48 = sbr.rel (0) target = $region21
    $region20: #{tpu_custom_call.1} parent=1 // pred_region
      %s50 = ssub.s32 128, 128
      %51 = vsyncadd [#allocation9], %s50
      %s53 = sshll.u32 [#allocation8], 4
      %s54 = int_to_ptr.vmem [resolvable:$true] %s53
      %56 = dma.hbm_to_vmem [thread:$0]  %s4, 128, %s54, [#allocation9]
    $region21: #{tpu_custom_call.1} parent=1 // pred_fallthru
      _
    // Predicated region
    $region22: #{tpu_custom_call.1} parent=1 // pred_check
      _
    $region23: #{tpu_custom_call.1} parent=1 // pred_check_branch
      %58 = sbr.rel (0) target = $region25
    $region24: #{tpu_custom_call.1} parent=1 // pred_region
      _
    $region25: #{tpu_custom_call.1} parent=1 // pred_fallthru
      _
    // Predicated region
    $region26: #{tpu_custom_call.1} parent=1 // pred_check
      _
    $region27: #{tpu_custom_call.1} parent=1 // pred_check_branch
      %60 = sbr.rel (0) target = $region29
    $region28: #{tpu_custom_call.1} parent=1 // pred_region
      %61 = dma.done [#allocation3], 128
    $region29: #{tpu_custom_call.1} parent=1 // pred_fallthru
      _
    // Predicated region
    $region30: #{tpu_custom_call.1} parent=1 // pred_check
      _
    $region31: #{tpu_custom_call.1} parent=1 // pred_check_branch
      %63 = sbr.rel (0) target = $region33
    $region32: #{tpu_custom_call.1} parent=1 // pred_region
      %64 = dma.done [#allocation6], 128
    $region33: #{tpu_custom_call.1} parent=1 // pred_fallthru
      _
    // Predicated region
    $region34: #{tpu_custom_call.1} parent=1 // pred_check
      _
    $region35: #{tpu_custom_call.1} parent=1 // pred_check_branch
      %66 = sbr.rel (0) target = $region37
    $region36: #{tpu_custom_call.1} parent=1 // pred_region
      %67 = dma.done [#allocation6], 128
    $region37: #{tpu_custom_call.1} parent=1 // pred_fallthru
      _
    // Predicated region
    $region38: #{tpu_custom_call.1} parent=1 // pred_check
      _
    $region39: #{tpu_custom_call.1} parent=1 // pred_check_branch
      %69 = sbr.rel (0) target = $region41
    $region40: #{tpu_custom_call.1} parent=1 // pred_region
      %70 = dma.done [#allocation9], 128
    $region41: #{tpu_custom_call.1} parent=1 // pred_fallthru
      _
    %v71 = vld [vmem:[#allocation2] sm:$0xff]
    %v72 = vld [vmem:[#allocation5] sm:$0xff]
    %v73 = vld [vmem:[#allocation7] sm:$0xff]
    %v74 = vld [vmem:[%s3] sm:$0xff]
    %v75 = vld [vmem:[#allocation8] sm:$0xff]
    %v76 = vmul.f32 %v71, %v71
    %v77 = vmul.f32 %v72, %v72
    %v78 = vmul.f32 %v73, %v73
    %v79 = vadd.f32 %v77, %v78
    %v80 = vadd.f32 %v79, 1e-06
    %v81 = vrsqrt.pop %v80
    %v82 = vsub.f32 0.0, %v81
    %v83 = vmul.f32 %v75, -0.5
    %v84 = vmul.f32 %v82, %v71
    %v85 = vadd.f32 %v83, %v84
    %v86 = vsub.f32 %v71, %v74
    %vm87 = vcmp.ge.f32.partialorder %v80, 400.0
    %v88 = vsel %vm87, 1, 0
    %v89 = vcvt.s32.f32 %v88
    %v90 = vmul.f32 %v85, %v71
    %91 = vadd.xlane.f32.xlu0 %v90
    %v92 = vpop.xlane.xlu0 %91
    %v93 = vrot.slane %v92, 4
    %v94 = vadd.f32 %v92, %v93
    %v95 = vrot.slane %v94, 2
    %v96 = vadd.f32 %v94, %v95
    %v97 = vrot.slane %v96, 1
    %v98 = vadd.f32 %v96, %v97
    %s99 = vtos %v98
    %v100 = vstv %s99
    %101 = vadd.xlane.f32.xlu0 %v76
    %v102 = vpop.xlane.xlu0 %101
    %v103 = vrot.slane %v102, 4
    %v104 = vadd.f32 %v102, %v103
    %v105 = vrot.slane %v104, 2
    %v106 = vadd.f32 %v104, %v105
    %v107 = vrot.slane %v106, 1
    %v108 = vadd.f32 %v106, %v107
    %s109 = vtos %v108
    %v110 = vstv %s109
    %v111 = vmul.f32 %v86, %v86
    %112 = vadd.xlane.f32.xlu0 %v111
    %v113 = vpop.xlane.xlu0 %112
    %v114 = vrot.slane %v113, 4
    %v115 = vadd.f32 %v113, %v114
    %v116 = vrot.slane %v115, 2
    %v117 = vadd.f32 %v115, %v116
    %v118 = vrot.slane %v117, 1
    %v119 = vadd.f32 %v117, %v118
    %s120 = vtos %v119
    %v121 = vstv %s120
    %122 = vadd.xlane.f32.xlu0 %v89
    %v123 = vpop.xlane.xlu0 %122
    %v124 = vrot.slane %v123, 4
    %v125 = vadd.f32 %v123, %v124
    %v126 = vrot.slane %v125, 2
    %v127 = vadd.f32 %v125, %v126
    %v128 = vrot.slane %v127, 1
    %v129 = vadd.f32 %v127, %v128
    %s130 = vtos %v129
    %v131 = vstv %s130
    %v132 = vmul.f32 %v76, %v89
    %133 = vadd.xlane.f32.xlu0 %v132
    %v134 = vpop.xlane.xlu0 %133
    %v135 = vrot.slane %v134, 4
    %v136 = vadd.f32 %v134, %v135
    %v137 = vrot.slane %v136, 2
    %v138 = vadd.f32 %v136, %v137
    %v139 = vrot.slane %v138, 1
    %v140 = vadd.f32 %v138, %v139
    %s141 = vtos %v140
    %v142 = vstv %s141
    %v143 = vmul.f32 %v100, 0.0009765625
    %v144 = vmul.f32 %v110, 0.0009765625
    %v145 = vmul.f32 %v121, 0.0009765625
    %v146 = vadd.f32 %v144, 1e-06
    %v147 = vrcp.pop %v146
    %v148 = vmul.f32 %v143, %v147
    %v149 = vmul.f32 %v148, %v71
    %v150 = vsub.f32 %v85, %v149
    %v151 = vmul.f32 %v150, %v150
    %152 = vadd.xlane.f32.xlu0 %v151
    %v153 = vpop.xlane.xlu0 %152
    %v154 = vrot.slane %v153, 4
    %v155 = vadd.f32 %v153, %v154
    %v156 = vrot.slane %v155, 2
    %v157 = vadd.f32 %v155, %v156
    %v158 = vrot.slane %v157, 1
    %v159 = vadd.f32 %v157, %v158
    %s160 = vtos %v159
    %v161 = vstv %s160
    %v162 = vmul.f32 %v161, 0.0009765625
    %vm163 = vcmp.gt.f32.partialorder %v131, 0.0
    %v164 = vmax.f32 %v131, 1.0
    %v165 = vrcp.pop %v164
    %v166 = vmul.f32 %v142, %v165
    %v167 = vsel %vm163, %v166, 0.0
    %v168 = vsub.f32 %v144, 1.0
    %v169 = vmul.f32 %v168, %v168
    %v170 = vadd.f32 %v169, 1e-06
    %v171 = vld [vmem:[%s5] sm:$0x1]
    %v172 = vmul.f32 %v171, -2.0
    %v173 = vmul.f32 %v172, 1.442695
    %v174 = vpow.pop %v173
    %v175 = vmul.f32 %v174, 0.5
    %vm176 = vcmask 24576
    %v177 = vsel %vm176, %v171, 0.0
    %178 = vadd.xlane.f32.xlu0 %v177
    %v179 = vpop.xlane.xlu0 %178
    %v180 = vmul.f32 %v162, %v175
    %v181 = vmul.f32 %v167, %v175
    %183 = vrot.lane.b32.xlu0 %v181, 127
    %v184 = vpop.permute.xlu0 %183
    %v186 = vadd.f32 %v180, %v184
    %v187 = vmul.f32 %v170, %v175
    %189 = vrot.lane.b32.xlu0 %v187, 126
    %v190 = vpop.permute.xlu0 %189
    %v192 = vadd.f32 %v186, %v190
    %v193 = vmul.f32 %v145, %v175
    %195 = vrot.lane.b32.xlu0 %v193, 125
    %v196 = vpop.permute.xlu0 %195
    %v198 = vadd.f32 %v192, %v196
    %v199 = vadd.f32 %v198, %v179
    %s200 = vtos %v199
    %s201 = scalar_lea.smem [#allocation10], 0
    %202 = sst [smem:[%s201]] %s200
    // Predicated region
    $region42: #{tpu_custom_call.1} parent=1 // pred_check
      _
    $region43: #{tpu_custom_call.1} parent=1 // pred_check_branch
      %204 = sbr.rel (0) target = $region45
    $region44: #{tpu_custom_call.1} parent=1 // pred_region
      %s206 = ssub.s32 16, 16
      %207 = vsyncadd [#allocation4], %s206
      %210 = dma.smem_to_hbm [#allocation10], 16, %s6, [#allocation4]
    $region45: #{tpu_custom_call.1} parent=1 // pred_fallthru
      _
    // Predicated region
    $region46: #{tpu_custom_call.1} parent=1 // pred_check
      _
    $region47: #{tpu_custom_call.1} parent=1 // pred_check_branch
      %212 = sbr.rel (0) target = $region49
    $region48: #{tpu_custom_call.1} parent=1 // pred_region
      %213 = dma.done [#allocation4], 16
    $region49: #{tpu_custom_call.1} parent=1 // pred_fallthru
      _
    %214 = sfence
    %215 = vsyncpa [#allocation3], 1
    %216 = vsyncpa [#allocation6], 1
    %217 = vsyncpa [#allocation9], 1
    %218 = vsyncpa [#allocation4], 1

</llo_original>
